<compile_context>
chip_gen: v5e
topology: v5e:2x2
jax: 0.10.0
libtpu: 0.0.40
codegen_flags: <defaults>
</compile_context>

<pallas_src>
import numpy as np

import jax
import jax.numpy as jnp
from jax.experimental import pallas as pl
from jax.experimental.pallas import tpu as pltpu

# ------------------------- module hyper-parameters --------------------------
BATCH_SIZE = 2
LF = 8
INPUT_CHANNELS = [4, 16]
OUTPUT_CHANNELS = [16, 32]
KERNEL_SIZE = [4, 4]
STRIDE = [2, 2]
PADDING = [1, 1]
NUM_LAYERS = len(INPUT_CHANNELS)
SEQ_LEN = 16
BN_EPS = 1e-5
LRELU_SLOPE = 0.01

# sequence lengths through the conv stack: [16, 8, 4]
L_SEQ = [SEQ_LEN]
for _i in range(NUM_LAYERS):
    L_SEQ.append((L_SEQ[-1] + 2 * PADDING[_i] - KERNEL_SIZE[_i]) // STRIDE[_i] + 1)

IN_COLS = INPUT_CHANNELS[0] * SEQ_LEN          # 64 (flattened input / recon width)
LANES = 128                                    # every weight matrix padded to 128 cols
PACK_PAD = LANES - IN_COLS - LF                # zero lanes in the packed output row

# ------------------------- packed weight-slab layout ------------------------
_W_LAYOUT = {}
_off = 0
for _name, _rows in [
    ("wc0", 64),    # Conv1d(4->16)   as dense (64,128)  (im2col / zero-pad baked in)
    ("wc1", 128),   # Conv1d(16->32)  as dense (128,128)
    ("we0", 128),   # Linear(128,32)  pre-transposed, cols 0:32 valid
    ("wcomb", 32),  # [enc1.T @ dec0.T | enc1.T] (32,40) valid  (enc1/dec0 folded)
    ("wd1", 32),    # Linear(32,128)  pre-transposed
    ("wt0", 128),   # ConvTranspose1d(32->16) as dense (128,128)
    ("wt1", 128),   # ConvTranspose1d(16->4)  as dense (128,64) valid
    ("r16", 128),   # BN reduce  (C*L=128, C=16): 1/(B*8) block pattern
    ("s16", 16),    # BN scatter (16,128): block-ones
    ("r32", 128),   # BN reduce  (128, 32): 1/(B*4) block pattern
    ("s32", 32),    # BN scatter (32,128)
]:
    _W_LAYOUT[_name] = (_off, _rows)
    _off += _rows
W_ROWS = _off                                   # 944 (multiple of 8)

_B_ROW = {"g0": 0, "b0": 1, "g1": 2, "b1": 3, "be0": 4, "bcomb": 5,
          "bd1": 6, "gt0": 7, "bt0": 8}
B_ROWS = 16


# ----------------------------- fused Pallas kernel ---------------------------

def _fused_forward_kernel(x_ref, w_ref, b_ref, out_ref):
    f32 = jnp.float32

    def w(name):
        off, rows = _W_LAYOUT[name]
        return w_ref[pl.ds(off, rows), :]

    def brow(name):
        return b_ref[pl.ds(_B_ROW[name], 1), :]          # (1, 128)

    def lrelu(v):
        return jnp.where(v > 0, v, LRELU_SLOPE * v)

    def mm(a, name):
        return jnp.dot(a, w(name), preferred_element_type=f32)

    def batchnorm(y, red_name, sct_name, c, g_name, bt_name):
        # Train-mode BatchNorm1d on a (B, C*L) channel-major activation.
        # Batch-axis reduction on the VPU; per-channel reduce/scatter via two
        # SMALL matmuls (no 128x128 group-mean matrices); f32 throughout.
        s0 = jnp.sum(y, axis=0, keepdims=True)
        s1 = jnp.sum(y * y, axis=0, keepdims=True)
        red = jnp.dot(jnp.concatenate([s0, s1], axis=0), w(red_name),
                      preferred_element_type=f32)[:, :c]          # (2, C): mean, E[y^2]
        mean_c = red[0:1, :]
        var_c = red[1:2, :] - mean_c * mean_c                     # biased variance
        inv_c = jax.lax.rsqrt(var_c + BN_EPS)
        bc = jnp.dot(jnp.concatenate([mean_c, inv_c], axis=0), w(sct_name),
                     preferred_element_type=f32)                  # (2, C*L) broadcast
        return brow(g_name) * (y - bc[0:1, :]) * bc[1:2, :] + brow(bt_name)

    x = x_ref[0]                                                   # (B, 64)

    # encoder conv stack: Conv -> LeakyReLU -> BatchNorm
    h = batchnorm(lrelu(mm(x, "wc0")), "r16", "s16", 16, "g0", "b0")   # 16ch x 8
    h = batchnorm(lrelu(mm(h, "wc1")), "r32", "s32", 32, "g1", "b1")   # 32ch x 4

    # encoder / decoder MLP; enc1 and dec0 folded into a single matmul
    z = jnp.maximum(mm(h, "we0") + brow("be0"), 0.0)               # cols 0:32 valid
    y4 = mm(z[:, :32], "wcomb") + brow("bcomb")                    # [dec0 preact | latent | 0]
    z2 = jnp.maximum(y4[:, :32], 0.0)                              # dec0 output (B, 32)
    lat = y4[:, 32:32 + LF]                                        # latent (B, LF), no activation
    h = mm(z2, "wd1") + brow("bd1")                                # (B,128) == view(B,32,4)

    # decoder deconv stack (last deconv: LeakyReLU only, no BN)
    h = batchnorm(lrelu(mm(h, "wt0")), "r16", "s16", 16, "gt0", "bt0")
    recon = lrelu(mm(h, "wt1"))[:, :IN_COLS]                       # (B, 64)

    # single lane-dense packed output row: [recon(64) | latent(8) | zeros(56)]
    out_ref[0] = jnp.concatenate(
        [recon, lat, jnp.zeros((BATCH_SIZE, PACK_PAD), f32)], axis=1)


# ----------------------------- wrapper ---------------------------------------

@jax.jit
def _forward_packed(wslab, bslab, x_flat):
    n = x_flat.shape[0]
    return pl.pallas_call(
        _fused_forward_kernel,
        out_shape=jax.ShapeDtypeStruct((n, BATCH_SIZE, LANES), jnp.float32),
        grid=(n,),
        in_specs=[
            pl.BlockSpec((1, BATCH_SIZE, IN_COLS), lambda i: (i, 0, 0)),
            pl.BlockSpec((W_ROWS, LANES), lambda i: (0, 0)),   # weights: fetched once, resident
            pl.BlockSpec((B_ROWS, LANES), lambda i: (0, 0)),
        ],
        out_specs=pl.BlockSpec((1, BATCH_SIZE, LANES), lambda i: (i, 0, 0)),
        compiler_params=pltpu.CompilerParams(
            dimension_semantics=("parallel",)),                 # both TensorCores on v7x
    )(x_flat, wslab, bslab)


def cnn_ae_forward(fused, x):
    """x: (..., BATCH_SIZE, 4, 16); leading dims = independent batch-2 forwards.
    Returns (reconstruction, latent) with matching leading dims."""
    single = (x.ndim == 3)
    if single:
        x = x[None]
    lead = x.shape[:-3]
    n = int(np.prod(lead)) if lead else 1
    x_flat = x.reshape(n, BATCH_SIZE, IN_COLS).astype(jnp.float32)
    packed = _forward_packed(fused["wslab"], fused["bslab"], x_flat)
    recon = packed[:, :, :IN_COLS].reshape(lead + (BATCH_SIZE, INPUT_CHANNELS[0], SEQ_LEN))
    latent = packed[:, :, IN_COLS:IN_COLS + LF].reshape(lead + (BATCH_SIZE, LF))
    if single:
        recon, latent = recon[0], latent[0]
    return recon, latent


# ----------------------------- one-time weight pre-transformation ------------

def _conv1d_as_matrix(w, l_in, stride, padding):
    """Conv1d weight (C_out, C_in, K) -> dense (C_in*L_in, C_out*L_out) on
    channel-major flattened sequences (padding/im2col baked in)."""
    w = np.asarray(w, np.float32)
    c_out, c_in, k_sz = w.shape
    l_out = (l_in + 2 * padding - k_sz) // stride + 1
    m = np.zeros((c_in * l_in, c_out * l_out), np.float32)
    rows = np.arange(c_in) * l_in
    cols = np.arange(c_out) * l_out
    for t in range(l_out):
        for k in range(k_sz):
            l = stride * t + k - padding
            if 0 <= l < l_in:
                m[np.ix_(rows + l, cols + t)] += w[:, :, k].T
    return m


def _convtranspose1d_as_matrix(w, l_in, stride, padding):
    """ConvTranspose1d weight (C_in, C_out, K) -> dense (C_in*L_in, C_out*L_out)."""
    w = np.asarray(w, np.float32)
    c_in, c_out, k_sz = w.shape
    l_out = (l_in - 1) * stride - 2 * padding + k_sz
    m = np.zeros((c_in * l_in, c_out * l_out), np.float32)
    rows = np.arange(c_in) * l_in
    cols = np.arange(c_out) * l_out
    for l in range(l_in):
        for k in range(k_sz):
            t = stride * l + k - padding
            if 0 <= t < l_out:
                m[np.ix_(rows + l, cols + t)] += w[:, :, k]
    return m


def _bn_reduce_matrix(channels, length):
    # (C*L, C): 1/(B*L) in each channel block -> per-channel mean / E[y^2]
    return np.kron(np.eye(channels, dtype=np.float32),
                   np.full((length, 1), 1.0 / (BATCH_SIZE * length), np.float32))


def _bn_scatter_matrix(channels, length):
    # (C, C*L): block-ones -> broadcast per-channel stats back to every column
    return np.kron(np.eye(channels, dtype=np.float32), np.ones((1, length), np.float32))


def precompute_fused(params):
    """One-time packing of PyTorch-layout params into the two kernel slabs."""
    wslab = np.zeros((W_ROWS, LANES), np.float32)

    def put(name, mat):
        off, rows = _W_LAYOUT[name]
        mat = np.asarray(mat, np.float32)
        assert mat.shape[0] == rows and mat.shape[1] <= LANES
        wslab[off:off + mat.shape[0], :mat.shape[1]] = mat

    put("wc0", _conv1d_as_matrix(params["conv0_w"], L_SEQ[0], STRIDE[0], PADDING[0]))
    put("wc1", _conv1d_as_matrix(params["conv1_w"], L_SEQ[1], STRIDE[1], PADDING[1]))
    put("we0", np.asarray(params["enc0_w"], np.float32).T)
    a = np.asarray(params["enc1_w"], np.float32).T            # (32, LF)
    bm = np.asarray(params["dec0_w"], np.float32).T           # (LF, 32)
    put("wcomb", np.concatenate([a @ bm, a], axis=1))          # [dec0-preact | latent] weights
    put("wd1", np.asarray(params["dec1_w"], np.float32).T)
    put("wt0", _convtranspose1d_as_matrix(params["deconv0_w"], L_SEQ[2], STRIDE[1], PADDING[1]))
    put("wt1", _convtranspose1d_as_matrix(params["deconv1_w"], L_SEQ[1], STRIDE[0], PADDING[0]))
    put("r16", _bn_reduce_matrix(OUTPUT_CHANNELS[0], L_SEQ[1]))
    put("s16", _bn_scatter_matrix(OUTPUT_CHANNELS[0], L_SEQ[1]))
    put("r32", _bn_reduce_matrix(OUTPUT_CHANNELS[1], L_SEQ[2]))
    put("s32", _bn_scatter_matrix(OUTPUT_CHANNELS[1], L_SEQ[2]))

    bslab = np.zeros((B_ROWS, LANES), np.float32)

    def putb(name, vec):
        vec = np.asarray(vec, np.float32).reshape(-1)
        bslab[_B_ROW[name], :vec.shape[0]] = vec

    putb("g0", np.repeat(np.asarray(params["conv0_g"], np.float32), L_SEQ[1]))
    putb("b0", np.repeat(np.asarray(params["conv0_b"], np.float32), L_SEQ[1]))
    putb("g1", np.repeat(np.asarray(params["conv1_g"], np.float32), L_SEQ[2]))
    putb("b1", np.repeat(np.asarray(params["conv1_b"], np.float32), L_SEQ[2]))
    putb("be0", params["enc0_b"])
    be1 = np.asarray(params["enc1_b"], np.float32)
    putb("bcomb", np.concatenate([be1 @ bm + np.asarray(params["dec0_b"], np.float32), be1]))
    putb("bd1", params["dec1_b"])
    putb("gt0", np.repeat(np.asarray(params["deconv0_g"], np.float32), L_SEQ[1]))
    putb("bt0", np.repeat(np.asarray(params["deconv0_b"], np.float32), L_SEQ[1]))

    return {"wslab": jnp.asarray(wslab), "bslab": jnp.asarray(bslab)}


# ----------------------------- parameters (PyTorch layouts) -------------------

def init_params(key):
    params = {}
    keys = jax.random.split(key, 32)
    ki = 0

    def nrm(shape):
        nonlocal ki
        v = 0.1 * jax.random.normal(keys[ki], shape, dtype=jnp.float32)
        ki += 1
        return v

    for i in range(NUM_LAYERS):
        params[f"conv{i}_w"] = nrm((OUTPUT_CHANNELS[i], INPUT_CHANNELS[i], KERNEL_SIZE[i]))
        params[f"conv{i}_g"] = 1.0 + nrm((OUTPUT_CHANNELS[i],))
        params[f"conv{i}_b"] = nrm((OUTPUT_CHANNELS[i],))

    for i in range(NUM_LAYERS):
        j = NUM_LAYERS - 1 - i
        params[f"deconv{i}_w"] = nrm((OUTPUT_CHANNELS[j], INPUT_CHANNELS[j], KERNEL_SIZE[j]))
        if i != NUM_LAYERS - 1:
            params[f"deconv{i}_g"] = 1.0 + nrm((INPUT_CHANNELS[j],))
            params[f"deconv{i}_b"] = nrm((INPUT_CHANNELS[j],))

    params["enc0_w"], params["enc0_b"] = nrm((32, 128)), nrm((32,))
    params["enc1_w"], params["enc1_b"] = nrm((LF, 32)), nrm((LF,))
    params["dec0_w"], params["dec0_b"] = nrm((32, LF)), nrm((32,))
    params["dec1_w"], params["dec1_b"] = nrm((128, 32)), nrm((128,))
    return params
    # TODO(synk): BatchNorm running_mean/var buffers are not tracked (forward-only,
    # train-mode batch statistics are used, matching a freshly-constructed nn.Module).


# ----------------------------- pure-JAX reference (validation only) -----------

def _reference_forward(params, x):
    """Reference of CNN_AE.forward for one batch x: (BATCH_SIZE, 4, 16)."""
    hp = jax.lax.Precision.HIGHEST

    def im2col(x, k, stride, padding):
        b, c, l = x.shape
        xp = jnp.pad(x, ((0, 0), (0, 0), (padding, padding)))
        l_out = (l + 2 * padding - k) // stride + 1
        idx = (jnp.arange(l_out) * stride)[:, None] + jnp.arange(k)[None, :]
        patches = xp[:, :, idx]
        return jnp.transpose(patches, (0, 2, 1, 3)).reshape(b * l_out, c * k), l_out

    def conv_lrelu_bn(x, w, gamma, beta, k, stride, padding):
        b, c_in, _ = x.shape
        c_out = w.shape[0]
        patches, l_out = im2col(x, k, stride, padding)
        y = jnp.dot(patches, w.reshape(c_out, c_in * k).T, precision=hp)
        y = jnp.where(y > 0, y, LRELU_SLOPE * y)
        if gamma is not None:
            mean = jnp.mean(y, axis=0, keepdims=True)
            var = jnp.mean((y - mean) ** 2, axis=0, keepdims=True)
            y = gamma * (y - mean) * jax.lax.rsqrt(var + BN_EPS) + beta
        return y.reshape(b, l_out, c_out).transpose(0, 2, 1)

    def deconv_lrelu_bn(x, w_t, gamma, beta, k, stride, padding):
        b, c, l = x.shape
        x_up = jnp.zeros((b, c, (l - 1) * stride + 1), x.dtype).at[:, :, ::stride].set(x)
        w_conv = jnp.flip(w_t, axis=2).transpose(1, 0, 2)
        return conv_lrelu_bn(x_up, w_conv, gamma, beta, k, 1, k - 1 - padding)

    def linear(x, w, bias, relu):
        y = jnp.dot(x, w.T, precision=hp) + bias
        return jnp.maximum(y, 0.0) if relu else y

    h = x
    for i in range(NUM_LAYERS):
        h = conv_lrelu_bn(h, params[f"conv{i}_w"], params[f"conv{i}_g"].reshape(1, -1),
                          params[f"conv{i}_b"].reshape(1, -1),
                          KERNEL_SIZE[i], STRIDE[i], PADDING[i])
    flat = h.reshape(-1, 128)
    z = linear(flat, params["enc0_w"], params["enc0_b"], True)
    latent = linear(z, params["enc1_w"], params["enc1_b"], False)
    z = linear(latent, params["dec0_w"], params["dec0_b"], True)
    out = linear(z, params["dec1_w"], params["dec1_b"], False)
    h = out.reshape(BATCH_SIZE, 32, 4)
    for i in range(NUM_LAYERS):
        j = NUM_LAYERS - 1 - i
        last = i == NUM_LAYERS - 1
        g = None if last else params[f"deconv{i}_g"].reshape(1, -1)
        b = None if last else params[f"deconv{i}_b"].reshape(1, -1)
        h = deconv_lrelu_bn(h, params[f"deconv{i}_w"], g, b,
                            KERNEL_SIZE[j], STRIDE[j], PADDING[j])
    return h, latent


# ----------------------------- main -------------------------------------------

if __name__ == "__main__":
    key = jax.random.PRNGKey(0)
    pkey, xkey = jax.random.split(key)
    params = init_params(pkey)
    fused = precompute_fused(params)     # one-time weight packing, outside the hot path

    n_forwards = 8                       # 8 independent batch-2 forwards in one call
    x = jax.random.normal(xkey, (n_forwards, BATCH_SIZE, INPUT_CHANNELS[0], SEQ_LEN),
                          dtype=jnp.float32)

    recon, latent = cnn_ae_forward(fused, x)
    recon = jax.block_until_ready(recon)
    latent = jax.block_until_ready(latent)

    assert recon.shape == (n_forwards, BATCH_SIZE, INPUT_CHANNELS[0], SEQ_LEN)
    assert latent.shape == (n_forwards, BATCH_SIZE, LF)
    assert bool(jnp.all(jnp.isfinite(recon))) and bool(jnp.all(jnp.isfinite(latent)))

    # module-shaped single-forward path
    r1, l1 = cnn_ae_forward(fused, x[0])
    r1 = jax.block_until_ready(r1)
    assert r1.shape == (BATCH_SIZE, INPUT_CHANNELS[0], SEQ_LEN)
    assert l1.shape == (BATCH_SIZE, LF)

    # cross-check the fused kernel against a pure-JAX reference of the module
    ref_recon, ref_latent = jax.vmap(lambda xb: _reference_forward(params, xb))(x)

    def rel_err(aa, bb):
        return float(jnp.linalg.norm((aa - bb).ravel()) /
                     (jnp.linalg.norm(bb.ravel()) + 1e-6))

    assert rel_err(recon, ref_recon) < 2e-2, ("recon mismatch", rel_err(recon, ref_recon))
    assert rel_err(latent, ref_latent) < 2e-2, ("latent mismatch", rel_err(latent, ref_latent))

    print("KERNEL_OK")
</pallas_src>

<mosaic_0001>
module attributes {stable_mosaic.version = 11 : i64} {
  func.func @_fused_forward_kernel(%arg0: i32, %arg1: memref<1x2x64xf32, #tpu.memory_space<vmem>>, %arg2: memref<944x128xf32, #tpu.memory_space<vmem>>, %arg3: memref<16x128xf32, #tpu.memory_space<vmem>>, %arg4: memref<1x2x128xf32, #tpu.memory_space<vmem>>) attributes {dimension_semantics = [#tpu.dimension_semantics<parallel>], iteration_bounds = array<i64: 8>, scalar_prefetch = 0 : i64, scratch_operands = 0 : i64, tpu.core_type = #tpu.core_type<tc>, window_params = [{transform_indices = @transform_0, window_bounds = array<i64: 1, 2, 64>}, {pipeline_mode = #tpu.pipeline_mode<synchronous>, transform_indices = @transform_1, window_bounds = array<i64: 944, 128>}, {pipeline_mode = #tpu.pipeline_mode<synchronous>, transform_indices = @transform_2, window_bounds = array<i64: 16, 128>}, {transform_indices = @transform_3, window_bounds = array<i64: 1, 2, 128>}]} {
    %c0 = arith.constant 0 : index
    %c0_0 = arith.constant 0 : index
    %c0_1 = arith.constant 0 : index
    %0 = vector.load %arg1[%c0, %c0_0, %c0_1] : memref<1x2x64xf32, #tpu.memory_space<vmem>>, vector<1x2x64xf32>
    %1 = vector.shape_cast %0 : vector<1x2x64xf32> to vector<2x64xf32>
    %c0_2 = arith.constant 0 : index
    %c0_3 = arith.constant 0 : index
    %2 = vector.load %arg2[%c0_2, %c0_3] : memref<944x128xf32, #tpu.memory_space<vmem>>, vector<64x128xf32>
    %cst = arith.constant dense<0.000000e+00> : vector<2x128xf32>
    %3 = tpu.matmul %1, %2, %cst {dimension_numbers = #tpu.dot_dimension_numbers<[1], [0], [0], [1], [0, 0, 1, 1], [], []>} : vector<2x64xf32>, vector<64x128xf32>, vector<2x128xf32> -> vector<2x128xf32>
    %cst_4 = arith.constant 0.000000e+00 : f32
    %4 = vector.broadcast %cst_4 : f32 to vector<2x128xf32>
    %5 = arith.cmpf ogt, %3, %4 : vector<2x128xf32>
    %cst_5 = arith.constant 0.00999999977 : f32
    %6 = vector.broadcast %cst_5 : f32 to vector<2x128xf32>
    %7 = arith.mulf %6, %3 : vector<2x128xf32>
    %8 = arith.select %5, %3, %7 : vector<2x128xi1>, vector<2x128xf32>
    %cst_6 = arith.constant dense<0.000000e+00> : vector<128xf32>
    %9 = vector.multi_reduction <add>, %8, %cst_6 [0] : vector<2x128xf32> to vector<128xf32>
    %10 = vector.shape_cast %9 : vector<128xf32> to vector<1x128xf32>
    %11 = arith.mulf %8, %8 : vector<2x128xf32>
    %cst_7 = arith.constant dense<0.000000e+00> : vector<128xf32>
    %12 = vector.multi_reduction <add>, %11, %cst_7 [0] : vector<2x128xf32> to vector<128xf32>
    %13 = vector.shape_cast %12 : vector<128xf32> to vector<1x128xf32>
    %14 = tpu.concatenate %10, %13 in 0 : vector<1x128xf32>, vector<1x128xf32> -> vector<2x128xf32>
    %c640 = arith.constant 640 : index
    %c0_8 = arith.constant 0 : index
    %15 = vector.load %arg2[%c640, %c0_8] : memref<944x128xf32, #tpu.memory_space<vmem>>, vector<128x128xf32>
    %cst_9 = arith.constant dense<0.000000e+00> : vector<2x128xf32>
    %16 = tpu.matmul %14, %15, %cst_9 {dimension_numbers = #tpu.dot_dimension_numbers<[1], [0], [0], [1], [0, 0, 1, 1], [], []>} : vector<2x128xf32>, vector<128x128xf32>, vector<2x128xf32> -> vector<2x128xf32>
    %17 = vector.extract_strided_slice %16 {offsets = [0, 0], sizes = [2, 16], strides = [1, 1]} : vector<2x128xf32> to vector<2x16xf32>
    %18 = vector.extract_strided_slice %17 {offsets = [0, 0], sizes = [1, 16], strides = [1, 1]} : vector<2x16xf32> to vector<1x16xf32>
    %19 = vector.extract_strided_slice %17 {offsets = [1, 0], sizes = [1, 16], strides = [1, 1]} : vector<2x16xf32> to vector<1x16xf32>
    %20 = arith.mulf %18, %18 : vector<1x16xf32>
    %21 = arith.subf %19, %20 : vector<1x16xf32>
    %cst_10 = arith.constant 9.99999974E-6 : f32
    %22 = vector.broadcast %cst_10 : f32 to vector<1x16xf32>
    %23 = arith.addf %21, %22 : vector<1x16xf32>
    %24 = math.rsqrt %23 : vector<1x16xf32>
    %25 = tpu.concatenate %18, %24 in 0 : vector<1x16xf32>, vector<1x16xf32> -> vector<2x16xf32>
    %c768 = arith.constant 768 : index
    %c0_11 = arith.constant 0 : index
    %26 = vector.load %arg2[%c768, %c0_11] : memref<944x128xf32, #tpu.memory_space<vmem>>, vector<16x128xf32>
    %cst_12 = arith.constant dense<0.000000e+00> : vector<2x128xf32>
    %27 = tpu.matmul %25, %26, %cst_12 {dimension_numbers = #tpu.dot_dimension_numbers<[1], [0], [0], [1], [0, 0, 1, 1], [], []>} : vector<2x16xf32>, vector<16x128xf32>, vector<2x128xf32> -> vector<2x128xf32>
    %c0_13 = arith.constant 0 : index
    %c0_14 = arith.constant 0 : index
    %28 = vector.load %arg3[%c0_13, %c0_14] : memref<16x128xf32, #tpu.memory_space<vmem>>, vector<1x128xf32>
    %29 = vector.extract_strided_slice %27 {offsets = [0, 0], sizes = [1, 128], strides = [1, 1]} : vector<2x128xf32> to vector<1x128xf32>
    %30 = vector.broadcast %29 : vector<1x128xf32> to vector<2x128xf32>
    %31 = arith.subf %8, %30 : vector<2x128xf32>
    %32 = vector.broadcast %28 : vector<1x128xf32> to vector<2x128xf32>
    %33 = arith.mulf %32, %31 : vector<2x128xf32>
    %34 = vector.extract_strided_slice %27 {offsets = [1, 0], sizes = [1, 128], strides = [1, 1]} : vector<2x128xf32> to vector<1x128xf32>
    %35 = vector.broadcast %34 : vector<1x128xf32> to vector<2x128xf32>
    %36 = arith.mulf %33, %35 : vector<2x128xf32>
    %c1 = arith.constant 1 : index
    %c0_15 = arith.constant 0 : index
    %37 = vector.load %arg3[%c1, %c0_15] : memref<16x128xf32, #tpu.memory_space<vmem>>, vector<1x128xf32>
    %38 = vector.broadcast %37 : vector<1x128xf32> to vector<2x128xf32>
    %39 = arith.addf %36, %38 : vector<2x128xf32>
    %c64 = arith.constant 64 : index
    %c0_16 = arith.constant 0 : index
    %40 = vector.load %arg2[%c64, %c0_16] : memref<944x128xf32, #tpu.memory_space<vmem>>, vector<128x128xf32>
    %cst_17 = arith.constant dense<0.000000e+00> : vector<2x128xf32>
    %41 = tpu.matmul %39, %40, %cst_17 {dimension_numbers = #tpu.dot_dimension_numbers<[1], [0], [0], [1], [0, 0, 1, 1], [], []>} : vector<2x128xf32>, vector<128x128xf32>, vector<2x128xf32> -> vector<2x128xf32>
    %cst_18 = arith.constant 0.000000e+00 : f32
    %42 = vector.broadcast %cst_18 : f32 to vector<2x128xf32>
    %43 = arith.cmpf ogt, %41, %42 : vector<2x128xf32>
    %cst_19 = arith.constant 0.00999999977 : f32
    %44 = vector.broadcast %cst_19 : f32 to vector<2x128xf32>
    %45 = arith.mulf %44, %41 : vector<2x128xf32>
    %46 = arith.select %43, %41, %45 : vector<2x128xi1>, vector<2x128xf32>
    %cst_20 = arith.constant dense<0.000000e+00> : vector<128xf32>
    %47 = vector.multi_reduction <add>, %46, %cst_20 [0] : vector<2x128xf32> to vector<128xf32>
    %48 = vector.shape_cast %47 : vector<128xf32> to vector<1x128xf32>
    %49 = arith.mulf %46, %46 : vector<2x128xf32>
    %cst_21 = arith.constant dense<0.000000e+00> : vector<128xf32>
    %50 = vector.multi_reduction <add>, %49, %cst_21 [0] : vector<2x128xf32> to vector<128xf32>
    %51 = vector.shape_cast %50 : vector<128xf32> to vector<1x128xf32>
    %52 = tpu.concatenate %48, %51 in 0 : vector<1x128xf32>, vector<1x128xf32> -> vector<2x128xf32>
    %c784 = arith.constant 784 : index
    %c0_22 = arith.constant 0 : index
    %53 = vector.load %arg2[%c784, %c0_22] : memref<944x128xf32, #tpu.memory_space<vmem>>, vector<128x128xf32>
    %cst_23 = arith.constant dense<0.000000e+00> : vector<2x128xf32>
    %54 = tpu.matmul %52, %53, %cst_23 {dimension_numbers = #tpu.dot_dimension_numbers<[1], [0], [0], [1], [0, 0, 1, 1], [], []>} : vector<2x128xf32>, vector<128x128xf32>, vector<2x128xf32> -> vector<2x128xf32>
    %55 = vector.extract_strided_slice %54 {offsets = [0, 0], sizes = [2, 32], strides = [1, 1]} : vector<2x128xf32> to vector<2x32xf32>
    %56 = vector.extract_strided_slice %55 {offsets = [0, 0], sizes = [1, 32], strides = [1, 1]} : vector<2x32xf32> to vector<1x32xf32>
    %57 = vector.extract_strided_slice %55 {offsets = [1, 0], sizes = [1, 32], strides = [1, 1]} : vector<2x32xf32> to vector<1x32xf32>
    %58 = arith.mulf %56, %56 : vector<1x32xf32>
    %59 = arith.subf %57, %58 : vector<1x32xf32>
    %cst_24 = arith.constant 9.99999974E-6 : f32
    %60 = vector.broadcast %cst_24 : f32 to vector<1x32xf32>
    %61 = arith.addf %59, %60 : vector<1x32xf32>
    %62 = math.rsqrt %61 : vector<1x32xf32>
    %63 = tpu.concatenate %56, %62 in 0 : vector<1x32xf32>, vector<1x32xf32> -> vector<2x32xf32>
    %c912 = arith.constant 912 : index
    %c0_25 = arith.constant 0 : index
    %64 = vector.load %arg2[%c912, %c0_25] : memref<944x128xf32, #tpu.memory_space<vmem>>, vector<32x128xf32>
    %cst_26 = arith.constant dense<0.000000e+00> : vector<2x128xf32>
    %65 = tpu.matmul %63, %64, %cst_26 {dimension_numbers = #tpu.dot_dimension_numbers<[1], [0], [0], [1], [0, 0, 1, 1], [], []>} : vector<2x32xf32>, vector<32x128xf32>, vector<2x128xf32> -> vector<2x128xf32>
    %c2 = arith.constant 2 : index
    %c0_27 = arith.constant 0 : index
    %66 = vector.load %arg3[%c2, %c0_27] : memref<16x128xf32, #tpu.memory_space<vmem>>, vector<1x128xf32>
    %67 = vector.extract_strided_slice %65 {offsets = [0, 0], sizes = [1, 128], strides = [1, 1]} : vector<2x128xf32> to vector<1x128xf32>
    %68 = vector.broadcast %67 : vector<1x128xf32> to vector<2x128xf32>
    %69 = arith.subf %46, %68 : vector<2x128xf32>
    %70 = vector.broadcast %66 : vector<1x128xf32> to vector<2x128xf32>
    %71 = arith.mulf %70, %69 : vector<2x128xf32>
    %72 = vector.extract_strided_slice %65 {offsets = [1, 0], sizes = [1, 128], strides = [1, 1]} : vector<2x128xf32> to vector<1x128xf32>
    %73 = vector.broadcast %72 : vector<1x128xf32> to vector<2x128xf32>
    %74 = arith.mulf %71, %73 : vector<2x128xf32>
    %c3 = arith.constant 3 : index
    %c0_28 = arith.constant 0 : index
    %75 = vector.load %arg3[%c3, %c0_28] : memref<16x128xf32, #tpu.memory_space<vmem>>, vector<1x128xf32>
    %76 = vector.broadcast %75 : vector<1x128xf32> to vector<2x128xf32>
    %77 = arith.addf %74, %76 : vector<2x128xf32>
    %c192 = arith.constant 192 : index
    %c0_29 = arith.constant 0 : index
    %78 = vector.load %arg2[%c192, %c0_29] : memref<944x128xf32, #tpu.memory_space<vmem>>, vector<128x128xf32>
    %cst_30 = arith.constant dense<0.000000e+00> : vector<2x128xf32>
    %79 = tpu.matmul %77, %78, %cst_30 {dimension_numbers = #tpu.dot_dimension_numbers<[1], [0], [0], [1], [0, 0, 1, 1], [], []>} : vector<2x128xf32>, vector<128x128xf32>, vector<2x128xf32> -> vector<2x128xf32>
    %c4 = arith.constant 4 : index
    %c0_31 = arith.constant 0 : index
    %80 = vector.load %arg3[%c4, %c0_31] : memref<16x128xf32, #tpu.memory_space<vmem>>, vector<1x128xf32>
    %81 = vector.broadcast %80 : vector<1x128xf32> to vector<2x128xf32>
    %82 = arith.addf %79, %81 : vector<2x128xf32>
    %cst_32 = arith.constant 0.000000e+00 : f32
    %83 = vector.broadcast %cst_32 : f32 to vector<2x128xf32>
    %84 = arith.maximumf %82, %83 : vector<2x128xf32>
    %85 = vector.extract_strided_slice %84 {offsets = [0, 0], sizes = [2, 32], strides = [1, 1]} : vector<2x128xf32> to vector<2x32xf32>
    %c320 = arith.constant 320 : index
    %c0_33 = arith.constant 0 : index
    %86 = vector.load %arg2[%c320, %c0_33] : memref<944x128xf32, #tpu.memory_space<vmem>>, vector<32x128xf32>
    %cst_34 = arith.constant dense<0.000000e+00> : vector<2x128xf32>
    %87 = tpu.matmul %85, %86, %cst_34 {dimension_numbers = #tpu.dot_dimension_numbers<[1], [0], [0], [1], [0, 0, 1, 1], [], []>} : vector<2x32xf32>, vector<32x128xf32>, vector<2x128xf32> -> vector<2x128xf32>
    %c5 = arith.constant 5 : index
    %c0_35 = arith.constant 0 : index
    %88 = vector.load %arg3[%c5, %c0_35] : memref<16x128xf32, #tpu.memory_space<vmem>>, vector<1x128xf32>
    %89 = vector.broadcast %88 : vector<1x128xf32> to vector<2x128xf32>
    %90 = arith.addf %87, %89 : vector<2x128xf32>
    %91 = vector.extract_strided_slice %90 {offsets = [0, 0], sizes = [2, 32], strides = [1, 1]} : vector<2x128xf32> to vector<2x32xf32>
    %cst_36 = arith.constant 0.000000e+00 : f32
    %92 = vector.broadcast %cst_36 : f32 to vector<2x32xf32>
    %93 = arith.maximumf %91, %92 : vector<2x32xf32>
    %94 = vector.extract_strided_slice %90 {offsets = [0, 32], sizes = [2, 8], strides = [1, 1]} : vector<2x128xf32> to vector<2x8xf32>
    %c352 = arith.constant 352 : index
    %c0_37 = arith.constant 0 : index
    %95 = vector.load %arg2[%c352, %c0_37] : memref<944x128xf32, #tpu.memory_space<vmem>>, vector<32x128xf32>
    %cst_38 = arith.constant dense<0.000000e+00> : vector<2x128xf32>
    %96 = tpu.matmul %93, %95, %cst_38 {dimension_numbers = #tpu.dot_dimension_numbers<[1], [0], [0], [1], [0, 0, 1, 1], [], []>} : vector<2x32xf32>, vector<32x128xf32>, vector<2x128xf32> -> vector<2x128xf32>
    %c6 = arith.constant 6 : index
    %c0_39 = arith.constant 0 : index
    %97 = vector.load %arg3[%c6, %c0_39] : memref<16x128xf32, #tpu.memory_space<vmem>>, vector<1x128xf32>
    %98 = vector.broadcast %97 : vector<1x128xf32> to vector<2x128xf32>
    %99 = arith.addf %96, %98 : vector<2x128xf32>
    %c384 = arith.constant 384 : index
    %c0_40 = arith.constant 0 : index
    %100 = vector.load %arg2[%c384, %c0_40] : memref<944x128xf32, #tpu.memory_space<vmem>>, vector<128x128xf32>
    %cst_41 = arith.constant dense<0.000000e+00> : vector<2x128xf32>
    %101 = tpu.matmul %99, %100, %cst_41 {dimension_numbers = #tpu.dot_dimension_numbers<[1], [0], [0], [1], [0, 0, 1, 1], [], []>} : vector<2x128xf32>, vector<128x128xf32>, vector<2x128xf32> -> vector<2x128xf32>
    %cst_42 = arith.constant 0.000000e+00 : f32
    %102 = vector.broadcast %cst_42 : f32 to vector<2x128xf32>
    %103 = arith.cmpf ogt, %101, %102 : vector<2x128xf32>
    %cst_43 = arith.constant 0.00999999977 : f32
    %104 = vector.broadcast %cst_43 : f32 to vector<2x128xf32>
    %105 = arith.mulf %104, %101 : vector<2x128xf32>
    %106 = arith.select %103, %101, %105 : vector<2x128xi1>, vector<2x128xf32>
    %cst_44 = arith.constant dense<0.000000e+00> : vector<128xf32>
    %107 = vector.multi_reduction <add>, %106, %cst_44 [0] : vector<2x128xf32> to vector<128xf32>
    %108 = vector.shape_cast %107 : vector<128xf32> to vector<1x128xf32>
    %109 = arith.mulf %106, %106 : vector<2x128xf32>
    %cst_45 = arith.constant dense<0.000000e+00> : vector<128xf32>
    %110 = vector.multi_reduction <add>, %109, %cst_45 [0] : vector<2x128xf32> to vector<128xf32>
    %111 = vector.shape_cast %110 : vector<128xf32> to vector<1x128xf32>
    %112 = tpu.concatenate %108, %111 in 0 : vector<1x128xf32>, vector<1x128xf32> -> vector<2x128xf32>
    %c640_46 = arith.constant 640 : index
    %c0_47 = arith.constant 0 : index
    %113 = vector.load %arg2[%c640_46, %c0_47] : memref<944x128xf32, #tpu.memory_space<vmem>>, vector<128x128xf32>
    %cst_48 = arith.constant dense<0.000000e+00> : vector<2x128xf32>
    %114 = tpu.matmul %112, %113, %cst_48 {dimension_numbers = #tpu.dot_dimension_numbers<[1], [0], [0], [1], [0, 0, 1, 1], [], []>} : vector<2x128xf32>, vector<128x128xf32>, vector<2x128xf32> -> vector<2x128xf32>
    %115 = vector.extract_strided_slice %114 {offsets = [0, 0], sizes = [2, 16], strides = [1, 1]} : vector<2x128xf32> to vector<2x16xf32>
    %116 = vector.extract_strided_slice %115 {offsets = [0, 0], sizes = [1, 16], strides = [1, 1]} : vector<2x16xf32> to vector<1x16xf32>
    %117 = vector.extract_strided_slice %115 {offsets = [1, 0], sizes = [1, 16], strides = [1, 1]} : vector<2x16xf32> to vector<1x16xf32>
    %118 = arith.mulf %116, %116 : vector<1x16xf32>
    %119 = arith.subf %117, %118 : vector<1x16xf32>
    %cst_49 = arith.constant 9.99999974E-6 : f32
    %120 = vector.broadcast %cst_49 : f32 to vector<1x16xf32>
    %121 = arith.addf %119, %120 : vector<1x16xf32>
    %122 = math.rsqrt %121 : vector<1x16xf32>
    %123 = tpu.concatenate %116, %122 in 0 : vector<1x16xf32>, vector<1x16xf32> -> vector<2x16xf32>
    %c768_50 = arith.constant 768 : index
    %c0_51 = arith.constant 0 : index
    %124 = vector.load %arg2[%c768_50, %c0_51] : memref<944x128xf32, #tpu.memory_space<vmem>>, vector<16x128xf32>
    %cst_52 = arith.constant dense<0.000000e+00> : vector<2x128xf32>
    %125 = tpu.matmul %123, %124, %cst_52 {dimension_numbers = #tpu.dot_dimension_numbers<[1], [0], [0], [1], [0, 0, 1, 1], [], []>} : vector<2x16xf32>, vector<16x128xf32>, vector<2x128xf32> -> vector<2x128xf32>
    %c7 = arith.constant 7 : index
    %c0_53 = arith.constant 0 : index
    %126 = vector.load %arg3[%c7, %c0_53] : memref<16x128xf32, #tpu.memory_space<vmem>>, vector<1x128xf32>
    %127 = vector.extract_strided_slice %125 {offsets = [0, 0], sizes = [1, 128], strides = [1, 1]} : vector<2x128xf32> to vector<1x128xf32>
    %128 = vector.broadcast %127 : vector<1x128xf32> to vector<2x128xf32>
    %129 = arith.subf %106, %128 : vector<2x128xf32>
    %130 = vector.broadcast %126 : vector<1x128xf32> to vector<2x128xf32>
    %131 = arith.mulf %130, %129 : vector<2x128xf32>
    %132 = vector.extract_strided_slice %125 {offsets = [1, 0], sizes = [1, 128], strides = [1, 1]} : vector<2x128xf32> to vector<1x128xf32>
    %133 = vector.broadcast %132 : vector<1x128xf32> to vector<2x128xf32>
    %134 = arith.mulf %131, %133 : vector<2x128xf32>
    %c8 = arith.constant 8 : index
    %c0_54 = arith.constant 0 : index
    %135 = vector.load %arg3[%c8, %c0_54] : memref<16x128xf32, #tpu.memory_space<vmem>>, vector<1x128xf32>
    %136 = vector.broadcast %135 : vector<1x128xf32> to vector<2x128xf32>
    %137 = arith.addf %134, %136 : vector<2x128xf32>
    %c512 = arith.constant 512 : index
    %c0_55 = arith.constant 0 : index
    %138 = vector.load %arg2[%c512, %c0_55] : memref<944x128xf32, #tpu.memory_space<vmem>>, vector<128x128xf32>
    %cst_56 = arith.constant dense<0.000000e+00> : vector<2x128xf32>
    %139 = tpu.matmul %137, %138, %cst_56 {dimension_numbers = #tpu.dot_dimension_numbers<[1], [0], [0], [1], [0, 0, 1, 1], [], []>} : vector<2x128xf32>, vector<128x128xf32>, vector<2x128xf32> -> vector<2x128xf32>
    %cst_57 = arith.constant 0.000000e+00 : f32
    %140 = vector.broadcast %cst_57 : f32 to vector<2x128xf32>
    %141 = arith.cmpf ogt, %139, %140 : vector<2x128xf32>
    %cst_58 = arith.constant 0.00999999977 : f32
    %142 = vector.broadcast %cst_58 : f32 to vector<2x128xf32>
    %143 = arith.mulf %142, %139 : vector<2x128xf32>
    %144 = arith.select %141, %139, %143 : vector<2x128xi1>, vector<2x128xf32>
    %145 = vector.extract_strided_slice %144 {offsets = [0, 0], sizes = [2, 64], strides = [1, 1]} : vector<2x128xf32> to vector<2x64xf32>
    %cst_59 = arith.constant 0.000000e+00 : f32
    %146 = vector.broadcast %cst_59 : f32 to vector<2x56xf32>
    %147 = tpu.concatenate %145, %94, %146 in 1 : vector<2x64xf32>, vector<2x8xf32>, vector<2x56xf32> -> vector<2x128xf32>
    %c0_60 = arith.constant 0 : index
    %c0_61 = arith.constant 0 : index
    %c0_62 = arith.constant 0 : index
    %148 = vector.load %arg4[%c0_60, %c0_61, %c0_62] : memref<1x2x128xf32, #tpu.memory_space<vmem>>, vector<1x2x128xf32>
    %149 = vector.shape_cast %148 : vector<1x2x128xf32> to vector<2x128xf32>
    %150 = vector.shape_cast %147 : vector<2x128xf32> to vector<1x2x128xf32>
    tpu.vector_store %arg4[%c0_60, %c0_61, %c0_62], %150 {strides = array<i32>} : memref<1x2x128xf32, #tpu.memory_space<vmem>>, vector<1x2x128xf32>,
    return
  }
  func.func @transform_0(%arg0: i32) -> (i32, i32, i32) {
    %c0_i32 = arith.constant 0 : i32
    %c0_i32_0 = arith.constant 0 : i32
    %c0_i32_1 = arith.constant 0 : i32
    return %arg0, %c0_i32, %c0_i32_0 : i32, i32, i32
  }
  func.func @transform_1(%arg0: i32) -> (i32, i32) {
    %c0_i32 = arith.constant 0 : i32
    %c0_i32_0 = arith.constant 0 : i32
    %c0_i32_1 = arith.constant 0 : i32
    return %c0_i32, %c0_i32_0 : i32, i32
  }
  func.func @transform_2(%arg0: i32) -> (i32, i32) {
    %c0_i32 = arith.constant 0 : i32
    %c0_i32_0 = arith.constant 0 : i32
    %c0_i32_1 = arith.constant 0 : i32
    return %c0_i32, %c0_i32_0 : i32, i32
  }
  func.func @transform_3(%arg0: i32) -> (i32, i32, i32) {
    %c0_i32 = arith.constant 0 : i32
    %c0_i32_0 = arith.constant 0 : i32
    %c0_i32_1 = arith.constant 0 : i32
    return %arg0, %c0_i32, %c0_i32_0 : i32, i32, i32
  }
}

</mosaic_0001>

<llo_original>
// kernel: _forward_packed.1
$region0: #{_forward_packed.1}
  #allocation0 [shape = 'u32[]', space=smem, size = 0x4, offset = 0x4, fixed_abs, tag = 'smem constant byte address 0x4 - core index']
  #allocation1 [shape = 'u32[72,128]{1,0:T(1,128)}', space=vmem, size = 0x9000, scoped, tag = 'internal scratch']
  %s0 = inlined_call_operand.hbm [shape: f32[8,2,64], index: 0, kind: input, shape index: {}]
  %s1 = inlined_call_operand.hbm [shape: f32[944,128], index: 1, kind: input, shape index: {}]
  %s2 = inlined_call_operand.hbm [shape: f32[16,128], index: 2, kind: input, shape index: {}]
  %s3 = inlined_call_operand.hbm [shape: f32[8,2,128], index: 3, kind: output, shape index: {}]
  %s4 = sld [smem:[#allocation0]]
  $region57: #{_forward_packed.1} parent=0
    _
  %s6 = ssub.s32 1, %s4
  %s7 = scalar_select 0, %s6, %s4
  $region1: #{_forward_packed.1} parent=0
    #allocation2 [shape = 'u8[2048]{0}', space=vmem, size = 0x800, scoped, tag = 'input window, operand 0']
    #allocation3 [shape = 's32[2]{0}', space=sflag, size = 0x8, scoped, tag = 'scoped memory for _forward_packed.1']
    #allocation4 [shape = 's32[2]{0}', space=sflag, size = 0x8, scoped, tag = 'scoped memory for _forward_packed.1']
    #allocation5 [shape = 'u8[483328]{0}', space=vmem, size = 0x76000, scoped, tag = 'input window, operand 1, single buffered']
    #allocation6 [shape = 's32[1]{0}', space=sflag, size = 0x4, scoped, tag = 'scoped memory for _forward_packed.1']
    #allocation7 [shape = 'u8[8192]{0}', space=vmem, size = 0x2000, scoped, tag = 'input window, operand 2, single buffered']
    #allocation8 [shape = 'u8[2048]{0}', space=vmem, size = 0x800, scoped, tag = 'output window, operand 0']
    %8 = vsyncpa [#allocation3], 0
    %s9 = scalar_lea.sflag [#allocation3], 1
    %10 = vsyncpa %s9, 0
    %11 = vsyncpa [#allocation6], 0
    %12 = vsyncpa [#allocation4], 0
    %s13 = scalar_lea.sflag [#allocation4], 1
    %14 = vsyncpa %s13, 0
    loop: start=0, step=1, limit=10
    $region2: #{_forward_packed.1} parent=1 // loop_pre_header
      _
    $region3: #{_forward_packed.1} parent=1 // loop_header
      %s16 = sphi 0, %s20
      %p17 = scmp.ge.s32.totalorder %s16, 10
      %s26 = sphi 0, %s28
      %s29 = sphi 0, %s26
      %s30 = sphi 0, %s29
      %s46 = sphi 0, %s30
      %s50 = sphi 0, %s50
      %s52 = sphi 0, %s50
      %s53 = sphi 0, %s52
      %s67 = sphi 0, %s53
      %s71 = sphi 0, %s71
      %s73 = sphi 0, %s71
      %s74 = sphi 0, %s73
      %s88 = sphi 0, %s74
      %s94 = sphi 0, %s96
      %s97 = sphi 0, %s94
      %s98 = sphi 0, %s97
      %s114 = sphi 0, %s98
    $region4: #{_forward_packed.1} parent=1 // loop_header_branch
      %19 = sbr.rel (%p17) target = $region8
    $region5: #{_forward_packed.1} parent=1 // loop_body
      %s21 = ssub.s32 %s16, 1
      %s22 = ssub.s32 %s16, 2
      %s23 = sadd.s32 %s16, 1
      %s24 = ssub.s32 %s16, %s23
      %p25 = scmp.eq.s32.totalorder %s24, 0
      %s27 = sadd.s32 %s26, 1
      %s28 = scalar_select %p25, %s26, %s27
      %p31 = pneg %p25
      %p32 = scmp.eq.s32.totalorder %s16, 7
      %p33 = por %p31, %p32
      %p34 = scmp.ne.s32.totalorder %s26, %s29
      %p35 = scmp.eq.s32.totalorder %s16, 0
      %p36 = por %p34, %p35
      %p37 = scmp.ne.s32.totalorder %s26, %s29
      %p38 = scmp.eq.s32.totalorder %s21, 7
      %p39 = por %p37, %p38
      %p40 = scmp.ne.s32.totalorder %s29, %s30
      %p41 = scmp.eq.s32.totalorder %s21, 0
      %p42 = por %p40, %p41
      %p43 = scmp.ne.s32.totalorder %s29, %s30
      %p44 = scmp.eq.s32.totalorder %s22, 7
      %p45 = por %p43, %p44
      %p47 = scmp.ne.s32.totalorder %s30, %s46
      %p48 = scmp.eq.s32.totalorder %s22, 0
      %p49 = por %p47, %p48
      %s51 = sadd.s32 %s50, 1
      %p54 = scmp.eq.s32.totalorder %s16, 7
      %p55 = scmp.ne.s32.totalorder %s50, %s52
      %p56 = scmp.eq.s32.totalorder %s16, 0
      %p57 = por %p55, %p56
      %p58 = scmp.ne.s32.totalorder %s50, %s52
      %p59 = scmp.eq.s32.totalorder %s21, 7
      %p60 = por %p58, %p59
      %p61 = scmp.ne.s32.totalorder %s52, %s53
      %p62 = scmp.eq.s32.totalorder %s21, 0
      %p63 = por %p61, %p62
      %p64 = scmp.ne.s32.totalorder %s52, %s53
      %p65 = scmp.eq.s32.totalorder %s22, 7
      %p66 = por %p64, %p65
      %p68 = scmp.ne.s32.totalorder %s53, %s67
      %p69 = scmp.eq.s32.totalorder %s22, 0
      %p70 = por %p68, %p69
      %s72 = sadd.s32 %s71, 1
      %p75 = scmp.eq.s32.totalorder %s16, 7
      %p76 = scmp.ne.s32.totalorder %s71, %s73
      %p77 = scmp.eq.s32.totalorder %s16, 0
      %p78 = por %p76, %p77
      %p79 = scmp.ne.s32.totalorder %s71, %s73
      %p80 = scmp.eq.s32.totalorder %s21, 7
      %p81 = por %p79, %p80
      %p82 = scmp.ne.s32.totalorder %s73, %s74
      %p83 = scmp.eq.s32.totalorder %s21, 0
      %p84 = por %p82, %p83
      %p85 = scmp.ne.s32.totalorder %s73, %s74
      %p86 = scmp.eq.s32.totalorder %s22, 7
      %p87 = por %p85, %p86
      %p89 = scmp.ne.s32.totalorder %s74, %s88
      %p90 = scmp.eq.s32.totalorder %s22, 0
      %p91 = por %p89, %p90
      %s92 = ssub.s32 %s16, %s23
      %p93 = scmp.eq.s32.totalorder %s92, 0
      %s95 = sadd.s32 %s94, 1
      %s96 = scalar_select %p93, %s94, %s95
      %p99 = pneg %p93
      %p100 = scmp.eq.s32.totalorder %s16, 7
      %p101 = por %p99, %p100
      %p102 = scmp.ne.s32.totalorder %s94, %s97
      %p103 = scmp.eq.s32.totalorder %s16, 0
      %p104 = por %p102, %p103
      %p105 = scmp.ne.s32.totalorder %s94, %s97
      %p106 = scmp.eq.s32.totalorder %s21, 7
      %p107 = por %p105, %p106
      %p108 = scmp.ne.s32.totalorder %s97, %s98
      %p109 = scmp.eq.s32.totalorder %s21, 0
      %p110 = por %p108, %p109
      %p111 = scmp.ne.s32.totalorder %s97, %s98
      %p112 = scmp.eq.s32.totalorder %s22, 7
      %p113 = por %p111, %p112
      %p115 = scmp.ne.s32.totalorder %s98, %s114
      %p116 = scmp.eq.s32.totalorder %s22, 0
      %p117 = por %p115, %p116
      %p118 = scmp.le.s32.totalorder 1, %s16
      %p119 = scmp.lt.s32.totalorder %s16, 9
      %p120 = pnand %p118, %p119
      %p121 = pneg %p120
      // Predicated region
      $region9: #{_forward_packed.1} parent=5 // pred_check
        _
      $region10: #{_forward_packed.1} parent=5 // pred_check_branch
        %123 = sbr.rel (%p120) target = $region12
      $region11: #{_forward_packed.1} parent=5 // pred_region
        %s124 = ssub.s32 %s16, 1
        // Predicated region
        $region13: #{_forward_packed.1} parent=11 // pred_check
          %p125 = pneg %p63
        $region14: #{_forward_packed.1} parent=11 // pred_check_branch
          %127 = sbr.rel (%p125) target = $region16
        $region15: #{_forward_packed.1} parent=11 // pred_region
          %129 = vsyncadd [#allocation6], 0
          %s130 = sshll.u32 %s1, 4
          %s131 = int_to_ptr.hbm [resolvable:$true] %s130
          %s132 = sshll.u32 [#allocation5], 4
          %s133 = int_to_ptr.vmem [resolvable:$true] %s132
          %138 = dma.hbm_to_vmem [thread:$0]  %s131, 15104, %s133, [#allocation6], 128, 128, 8
        $region16: #{_forward_packed.1} parent=11 // pred_fallthru
          _
        // Predicated region
        $region17: #{_forward_packed.1} parent=11 // pred_check
          %p139 = pneg %p84
        $region18: #{_forward_packed.1} parent=11 // pred_check_branch
          %141 = sbr.rel (%p139) target = $region20
        $region19: #{_forward_packed.1} parent=11 // pred_region
          %143 = vsyncadd [#allocation6], 0
          %s144 = sshll.u32 %s2, 4
          %s145 = int_to_ptr.hbm [resolvable:$true] %s144
          %s146 = sshll.u32 [#allocation7], 4
          %s147 = int_to_ptr.vmem [resolvable:$true] %s146
          %152 = dma.hbm_to_vmem [thread:$0]  %s145, 256, %s147, [#allocation6], 128, 128, 8
        $region20: #{_forward_packed.1} parent=11 // pred_fallthru
          _
      $region12: #{_forward_packed.1} parent=5 // pred_fallthru
        _
      %p153 = scmp.lt.s32.totalorder %s16, 8
      // Predicated region
      $region21: #{_forward_packed.1} parent=5 // pred_check
        %p154 = pneg %p153
      $region22: #{_forward_packed.1} parent=5 // pred_check_branch
        %156 = sbr.rel (%p154) target = $region24
      $region23: #{_forward_packed.1} parent=5 // pred_region
        // Predicated region
        $region25: #{_forward_packed.1} parent=23 // pred_check
          %p157 = pneg %p36
        $region26: #{_forward_packed.1} parent=23 // pred_check_branch
          %159 = sbr.rel (%p157) target = $region28
        $region27: #{_forward_packed.1} parent=23 // pred_region
          %s160 = sand.u32 %s26, 1
          %s161 = scalar_lea.sflag [#allocation3], %s160
          %s162 = sand.u32 %s26, 1
          %s163 = smul.addr %s162, 2
          %s164 = scalar_lea.vmem [#allocation2], %s163
          %166 = vsyncadd %s161, 0
          %s167 = smul.addr %s16, 2
          %s168 = scalar_lea.hbm %s0, %s167
          %s170 = sshll.u32 %s168, 4
          %s171 = int_to_ptr.hbm [resolvable:$true] %s170
          %s172 = sshll.u32 %s164, 4
          %s173 = int_to_ptr.vmem [resolvable:$true] %s172
          %175 = dma.hbm_to_vmem [thread:$0]  %s171, 32, %s173, %s161
        $region28: #{_forward_packed.1} parent=23 // pred_fallthru
          _
      $region24: #{_forward_packed.1} parent=5 // pred_fallthru
        _
      %p176 = scmp.le.s32.totalorder 1, %s16
      %p177 = scmp.lt.s32.totalorder %s16, 9
      %p178 = pnand %p176, %p177
      %p179 = pneg %p178
      // Predicated region
      $region29: #{_forward_packed.1} parent=5 // pred_check
        _
      $region30: #{_forward_packed.1} parent=5 // pred_check_branch
        %181 = sbr.rel (%p178) target = $region32
      $region31: #{_forward_packed.1} parent=5 // pred_region
        %s182 = ssub.s32 %s16, 1
        %s183 = sand.u32 %s29, 1
        %s184 = scalar_lea.sflag [#allocation3], %s183
        %s185 = sand.u32 %s29, 1
        %s186 = smul.addr %s185, 2
        %s187 = scalar_lea.vmem [#allocation2], %s186
        // Predicated region
        $region33: #{_forward_packed.1} parent=31 // pred_check
          %p188 = pneg %p42
        $region34: #{_forward_packed.1} parent=31 // pred_check_branch
          %190 = sbr.rel (%p188) target = $region36
        $region35: #{_forward_packed.1} parent=31 // pred_region
          %192 = dma.done %s184, 32
        $region36: #{_forward_packed.1} parent=31 // pred_fallthru
          _
        // Predicated region
        $region37: #{_forward_packed.1} parent=31 // pred_check
          %p193 = pneg %p63
        $region38: #{_forward_packed.1} parent=31 // pred_check_branch
          %195 = sbr.rel (%p193) target = $region40
        $region39: #{_forward_packed.1} parent=31 // pred_region
          %197 = dma.done [#allocation6], 15104
        $region40: #{_forward_packed.1} parent=31 // pred_fallthru
          _
        // Predicated region
        $region41: #{_forward_packed.1} parent=31 // pred_check
          %p198 = pneg %p84
        $region42: #{_forward_packed.1} parent=31 // pred_check_branch
          %200 = sbr.rel (%p198) target = $region44
        $region43: #{_forward_packed.1} parent=31 // pred_region
          %202 = dma.done [#allocation6], 256
        $region44: #{_forward_packed.1} parent=31 // pred_fallthru
          _
        %s203 = sand.u32 %s29, 1
        %s204 = scalar_lea.sflag [#allocation3], %s203
        %s205 = sand.u32 %s29, 1
        %s206 = smul.addr %s205, 2
        %s207 = scalar_lea.vmem [#allocation2], %s206
        %p208 = pneg %p42
        %p209 = pneg %p39
        %p210 = pneg %p63
        %p211 = pneg %p60
        %p212 = pneg %p84
        %p213 = pneg %p81
        %p214 = pneg %p110
        %p215 = pneg %p107
        %s216 = sand.u32 %s97, 1
        %s217 = scalar_lea.sflag [#allocation4], %s216
        %s218 = sand.u32 %s97, 1
        %s219 = smul.addr %s218, 2
        %s220 = scalar_lea.vmem [#allocation8], %s219
        %v221 = vld [vmem:[%s187] sm:$0x3]
        %v222 = vld [vmem:[#allocation5] sm:$0xff]
        %v223 = vld [vmem:[#allocation5 + $0x8] sm:$0xff]
        %v224 = vld [vmem:[#allocation5 + $0x10] sm:$0xff]
        %v225 = vld [vmem:[#allocation5 + $0x18] sm:$0xff]
        %v226 = vld [vmem:[#allocation5 + $0x20] sm:$0xff]
        %v227 = vld [vmem:[#allocation5 + $0x28] sm:$0xff]
        %v228 = vld [vmem:[#allocation5 + $0x30] sm:$0xff]
        %v229 = vld [vmem:[#allocation5 + $0x38] sm:$0xff]
        %vm230 = vcmask 523264
        %v232 = vsel %vm230, %v221, 0
        %234 = vmatpush.msra.mxu0 0.0
        %235 = vmatpush.msra.mxu0 0.0
        %236 = vmatpush.msra.mxu0 0.0
        %237 = vmatpush.msra.mxu0 0.0
        %238 = vmatpush.msra.mxu0 0.0
        %239 = vmatpush.msra.mxu0 0.0
        %240 = vmatpush.msra.mxu0 0.0
        %241 = vmatpush.msra.mxu0 0.0
        %242 = vmatpush.msra.mxu0 %v229
        %243 = vmatpush.msra.mxu0 %v228
        %244 = vmatpush.msra.mxu0 %v227
        %245 = vmatpush.msra.mxu0 %v226
        %246 = vmatpush.msra.mxu0 %v225
        %247 = vmatpush.msra.mxu0 %v224
        %248 = vmatpush.msra.mxu0 %v223
        %249 = vmatpush.msra.mxu0 %v222
        %250 = vmatmul.f32.gmra.mxu0 %v232
        %v251 = vpop.f32.mrf.mxu0
        %v252 = vadd.f32 0.0, %v251
        %253 = vdwg.mxu0
        %vm254 = vcmp.gt.f32.partialorder %v252, 0.0
        %v255 = vmul.f32 %v252, 0.01
        %v256 = vsel %vm254, %v252, %v255
        %vm257 = vcmask 1041408
        %v258 = vsel %vm257, %v256, 0.0
        %v259 = vrot.slane %v258, 4
        %v260 = vadd.f32 %v258, %v259
        %v261 = vrot.slane %v260, 2
        %v262 = vadd.f32 %v260, %v261
        %v263 = vrot.slane %v262, 1
        %v264 = vadd.f32 %v262, %v263
        %v265 = vmul.f32 %v256, %v256
        %v266 = vsel %vm257, %v265, 0.0
        %v267 = vrot.slane %v266, 4
        %v268 = vadd.f32 %v266, %v267
        %v269 = vrot.slane %v268, 2
        %v270 = vadd.f32 %v268, %v269
        %v271 = vrot.slane %v270, 1
        %v272 = vadd.f32 %v270, %v271
        %vm273 = vcmask 1040384
        %v274 = vsel %vm273, %v264, %v272
        %v275 = vld [vmem:[#allocation5 + $0x280] sm:$0xff]
        %v276 = vld [vmem:[#allocation5 + $0x288] sm:$0xff]
        %v277 = vld [vmem:[#allocation5 + $0x290] sm:$0xff]
        %v278 = vld [vmem:[#allocation5 + $0x298] sm:$0xff]
        %v279 = vld [vmem:[#allocation5 + $0x2a0] sm:$0xff]
        %v280 = vld [vmem:[#allocation5 + $0x2a8] sm:$0xff]
        %v281 = vld [vmem:[#allocation5 + $0x2b0] sm:$0xff]
        %v282 = vld [vmem:[#allocation5 + $0x2b8] sm:$0xff]
        %v283 = vld [vmem:[#allocation5 + $0x2c0] sm:$0xff]
        %v284 = vld [vmem:[#allocation5 + $0x2c8] sm:$0xff]
        %v285 = vld [vmem:[#allocation5 + $0x2d0] sm:$0xff]
        %v286 = vld [vmem:[#allocation5 + $0x2d8] sm:$0xff]
        %v287 = vld [vmem:[#allocation5 + $0x2e0] sm:$0xff]
        %v288 = vld [vmem:[#allocation5 + $0x2e8] sm:$0xff]
        %v289 = vld [vmem:[#allocation5 + $0x2f0] sm:$0xff]
        %v290 = vld [vmem:[#allocation5 + $0x2f8] sm:$0xff]
        %291 = vmatpush.msra.mxu0 %v290
        %292 = vmatpush.msra.mxu0 %v289
        %293 = vmatpush.msra.mxu0 %v288
        %294 = vmatpush.msra.mxu0 %v287
        %295 = vmatpush.msra.mxu0 %v286
        %296 = vmatpush.msra.mxu0 %v285
        %297 = vmatpush.msra.mxu0 %v284
        %298 = vmatpush.msra.mxu0 %v283
        %299 = vmatpush.msra.mxu0 %v282
        %300 = vmatpush.msra.mxu0 %v281
        %301 = vmatpush.msra.mxu0 %v280
        %302 = vmatpush.msra.mxu0 %v279
        %303 = vmatpush.msra.mxu0 %v278
        %304 = vmatpush.msra.mxu0 %v277
        %305 = vmatpush.msra.mxu0 %v276
        %306 = vmatpush.msra.mxu0 %v275
        %307 = vmatmul.f32.gmra.mxu0 %v274
        %v308 = vpop.f32.mrf.mxu0
        %v309 = vadd.f32 0.0, %v308
        %310 = vdwg.mxu0
        %v311 = vmul.f32 %v309, %v309
        %v313 = vrot.slane %v311, 7
        %v315 = vsub.f32 %v309, %v313
        %v316 = vadd.f32 %v315, 1e-05
        %v317 = vrsqrt.pop %v316
        %v318 = vmul.f32 %v317, %v316
        %v319 = vmul.f32 %v318, %v317
        %v320 = vmul.f32 0.5, %v319
        %v321 = vsub.f32 1.5, %v320
        %v322 = vmul.f32 %v317, %v321
        %vm323 = vweird.f32 %v316
        %vm324 = vweird.f32 %v317
        %vm325 = vmor %vm323, %vm324
        %v326 = vsel %vm325, %v317, %v322
        %v327 = vsel %vm273, %v309, %v326
        %v328 = vld [vmem:[#allocation5 + $0x300] sm:$0xff]
        %v329 = vld [vmem:[#allocation5 + $0x308] sm:$0xff]
        %vm330 = vcmask 130048
        %v332 = vsel %vm330, %v327, 0
        %334 = vmatpush.msra.mxu0 0.0
        %335 = vmatpush.msra.mxu0 0.0
        %336 = vmatpush.msra.mxu0 0.0
        %337 = vmatpush.msra.mxu0 0.0
        %338 = vmatpush.msra.mxu0 0.0
        %339 = vmatpush.msra.mxu0 0.0
        %340 = vmatpush.msra.mxu0 0.0
        %341 = vmatpush.msra.mxu0 0.0
        %342 = vmatpush.msra.mxu0 0.0
        %343 = vmatpush.msra.mxu0 0.0
        %344 = vmatpush.msra.mxu0 0.0
        %345 = vmatpush.msra.mxu0 0.0
        %346 = vmatpush.msra.mxu0 0.0
        %347 = vmatpush.msra.mxu0 0.0
        %348 = vmatpush.msra.mxu0 %v329
        %349 = vmatpush.msra.mxu0 %v328
        %350 = vmatmul.f32.gmra.mxu0 %v332
        %v351 = vpop.f32.mrf.mxu0
        %v352 = vadd.f32 0.0, %v351
        %353 = vdwg.mxu0
        %v354 = vld [vmem:[#allocation7] sm:$0x1]
        %v355 = vperm.slane %v352, 0
        %v356 = vsub.f32 %v256, %v355
        %v357 = vperm.slane %v354, 0
        %v358 = vmul.f32 %v357, %v356
        %v359 = vperm.slane %v352, 1
        %v360 = vmul.f32 %v358, %v359
        %v361 = vld [vmem:[#allocation7 + $0x1] sm:$0x1]
        %v362 = vperm.slane %v361, 0
        %v363 = vadd.f32 %v360, %v362
        %v364 = vld [vmem:[#allocation5 + $0x40] sm:$0xff]
        %v365 = vld [vmem:[#allocation5 + $0x48] sm:$0xff]
        %v366 = vld [vmem:[#allocation5 + $0x50] sm:$0xff]
        %v367 = vld [vmem:[#allocation5 + $0x58] sm:$0xff]
        %v368 = vld [vmem:[#allocation5 + $0x60] sm:$0xff]
        %v369 = vld [vmem:[#allocation5 + $0x68] sm:$0xff]
        %v370 = vld [vmem:[#allocation5 + $0x70] sm:$0xff]
        %v371 = vld [vmem:[#allocation5 + $0x78] sm:$0xff]
        %v372 = vld [vmem:[#allocation5 + $0x80] sm:$0xff]
        %v373 = vld [vmem:[#allocation5 + $0x88] sm:$0xff]
        %v374 = vld [vmem:[#allocation5 + $0x90] sm:$0xff]
        %v375 = vld [vmem:[#allocation5 + $0x98] sm:$0xff]
        %v376 = vld [vmem:[#allocation5 + $0xa0] sm:$0xff]
        %v377 = vld [vmem:[#allocation5 + $0xa8] sm:$0xff]
        %v378 = vld [vmem:[#allocation5 + $0xb0] sm:$0xff]
        %v379 = vld [vmem:[#allocation5 + $0xb8] sm:$0xff]
        %380 = vmatpush.msra.mxu0 %v379
        %381 = vmatpush.msra.mxu0 %v378
        %382 = vmatpush.msra.mxu0 %v377
        %383 = vmatpush.msra.mxu0 %v376
        %384 = vmatpush.msra.mxu0 %v375
        %385 = vmatpush.msra.mxu0 %v374
        %386 = vmatpush.msra.mxu0 %v373
        %387 = vmatpush.msra.mxu0 %v372
        %388 = vmatpush.msra.mxu0 %v371
        %389 = vmatpush.msra.mxu0 %v370
        %390 = vmatpush.msra.mxu0 %v369
        %391 = vmatpush.msra.mxu0 %v368
        %392 = vmatpush.msra.mxu0 %v367
        %393 = vmatpush.msra.mxu0 %v366
        %394 = vmatpush.msra.mxu0 %v365
        %395 = vmatpush.msra.mxu0 %v364
        %396 = vmatmul.f32.gmra.mxu0 %v363
        %v397 = vpop.f32.mrf.mxu0
        %v398 = vadd.f32 0.0, %v397
        %399 = vdwg.mxu0
        %vm400 = vcmp.gt.f32.partialorder %v398, 0.0
        %v401 = vmul.f32 %v398, 0.01
        %v402 = vsel %vm400, %v398, %v401
        %v403 = vsel %vm257, %v402, 0.0
        %v404 = vrot.slane %v403, 4
        %v405 = vadd.f32 %v403, %v404
        %v406 = vrot.slane %v405, 2
        %v407 = vadd.f32 %v405, %v406
        %v408 = vrot.slane %v407, 1
        %v409 = vadd.f32 %v407, %v408
        %v410 = vmul.f32 %v402, %v402
        %v411 = vsel %vm257, %v410, 0.0
        %v412 = vrot.slane %v411, 4
        %v413 = vadd.f32 %v411, %v412
        %v414 = vrot.slane %v413, 2
        %v415 = vadd.f32 %v413, %v414
        %v416 = vrot.slane %v415, 1
        %v417 = vadd.f32 %v415, %v416
        %v418 = vsel %vm273, %v409, %v417
        %v419 = vld [vmem:[#allocation5 + $0x310] sm:$0xff]
        %v420 = vld [vmem:[#allocation5 + $0x318] sm:$0xff]
        %v421 = vld [vmem:[#allocation5 + $0x320] sm:$0xff]
        %v422 = vld [vmem:[#allocation5 + $0x328] sm:$0xff]
        %v423 = vld [vmem:[#allocation5 + $0x330] sm:$0xff]
        %v424 = vld [vmem:[#allocation5 + $0x338] sm:$0xff]
        %v425 = vld [vmem:[#allocation5 + $0x340] sm:$0xff]
        %v426 = vld [vmem:[#allocation5 + $0x348] sm:$0xff]
        %v427 = vld [vmem:[#allocation5 + $0x350] sm:$0xff]
        %v428 = vld [vmem:[#allocation5 + $0x358] sm:$0xff]
        %v429 = vld [vmem:[#allocation5 + $0x360] sm:$0xff]
        %v430 = vld [vmem:[#allocation5 + $0x368] sm:$0xff]
        %v431 = vld [vmem:[#allocation5 + $0x370] sm:$0xff]
        %v432 = vld [vmem:[#allocation5 + $0x378] sm:$0xff]
        %v433 = vld [vmem:[#allocation5 + $0x380] sm:$0xff]
        %v434 = vld [vmem:[#allocation5 + $0x388] sm:$0xff]
        %435 = vmatpush.msra.mxu0 %v434
        %436 = vmatpush.msra.mxu0 %v433
        %437 = vmatpush.msra.mxu0 %v432
        %438 = vmatpush.msra.mxu0 %v431
        %439 = vmatpush.msra.mxu0 %v430
        %440 = vmatpush.msra.mxu0 %v429
        %441 = vmatpush.msra.mxu0 %v428
        %442 = vmatpush.msra.mxu0 %v427
        %443 = vmatpush.msra.mxu0 %v426
        %444 = vmatpush.msra.mxu0 %v425
        %445 = vmatpush.msra.mxu0 %v424
        %446 = vmatpush.msra.mxu0 %v423
        %447 = vmatpush.msra.mxu0 %v422
        %448 = vmatpush.msra.mxu0 %v421
        %449 = vmatpush.msra.mxu0 %v420
        %450 = vmatpush.msra.mxu0 %v419
        %451 = vmatmul.f32.gmra.mxu0 %v418
        %v452 = vpop.f32.mrf.mxu0
        %v453 = vadd.f32 0.0, %v452
        %454 = vdwg.mxu0
        %v455 = vmul.f32 %v453, %v453
        %v457 = vrot.slane %v455, 7
        %v459 = vsub.f32 %v453, %v457
        %v460 = vadd.f32 %v459, 1e-05
        %v461 = vrsqrt.pop %v460
        %v462 = vmul.f32 %v461, %v460
        %v463 = vmul.f32 %v462, %v461
        %v464 = vmul.f32 0.5, %v463
        %v465 = vsub.f32 1.5, %v464
        %v466 = vmul.f32 %v461, %v465
        %vm467 = vweird.f32 %v460
        %vm468 = vweird.f32 %v461
        %vm469 = vmor %vm467, %vm468
        %v470 = vsel %vm469, %v461, %v466
        %v471 = vsel %vm273, %v453, %v470
        %v472 = vld [vmem:[#allocation5 + $0x390] sm:$0xff]
        %v473 = vld [vmem:[#allocation5 + $0x398] sm:$0xff]
        %v474 = vld [vmem:[#allocation5 + $0x3a0] sm:$0xff]
        %v475 = vld [vmem:[#allocation5 + $0x3a8] sm:$0xff]
        %vm476 = vcmask 261120
        %v478 = vsel %vm476, %v471, 0
        %480 = vmatpush.msra.mxu0 0.0
        %481 = vmatpush.msra.mxu0 0.0
        %482 = vmatpush.msra.mxu0 0.0
        %483 = vmatpush.msra.mxu0 0.0
        %484 = vmatpush.msra.mxu0 0.0
        %485 = vmatpush.msra.mxu0 0.0
        %486 = vmatpush.msra.mxu0 0.0
        %487 = vmatpush.msra.mxu0 0.0
        %488 = vmatpush.msra.mxu0 0.0
        %489 = vmatpush.msra.mxu0 0.0
        %490 = vmatpush.msra.mxu0 0.0
        %491 = vmatpush.msra.mxu0 0.0
        %492 = vmatpush.msra.mxu0 %v475
        %493 = vmatpush.msra.mxu0 %v474
        %494 = vmatpush.msra.mxu0 %v473
        %495 = vmatpush.msra.mxu0 %v472
        %496 = vmatmul.f32.gmra.mxu0 %v478
        %v497 = vpop.f32.mrf.mxu0
        %v498 = vadd.f32 0.0, %v497
        %499 = vdwg.mxu0
        %v500 = vld [vmem:[#allocation7 + $0x2] sm:$0x1]
        %v501 = vperm.slane %v498, 0
        %v502 = vsub.f32 %v402, %v501
        %v503 = vperm.slane %v500, 0
        %v504 = vmul.f32 %v503, %v502
        %v505 = vperm.slane %v498, 1
        %v506 = vmul.f32 %v504, %v505
        %v507 = vld [vmem:[#allocation7 + $0x3] sm:$0x1]
        %v508 = vperm.slane %v507, 0
        %v509 = vadd.f32 %v506, %v508
        %v510 = vld [vmem:[#allocation5 + $0xc0] sm:$0xff]
        %v511 = vld [vmem:[#allocation5 + $0xc8] sm:$0xff]
        %v512 = vld [vmem:[#allocation5 + $0xd0] sm:$0xff]
        %v513 = vld [vmem:[#allocation5 + $0xd8] sm:$0xff]
        %v514 = vld [vmem:[#allocation5 + $0xe0] sm:$0xff]
        %v515 = vld [vmem:[#allocation5 + $0xe8] sm:$0xff]
        %v516 = vld [vmem:[#allocation5 + $0xf0] sm:$0xff]
        %v517 = vld [vmem:[#allocation5 + $0xf8] sm:$0xff]
        %v518 = vld [vmem:[#allocation5 + $0x100] sm:$0xff]
        %v519 = vld [vmem:[#allocation5 + $0x108] sm:$0xff]
        %v520 = vld [vmem:[#allocation5 + $0x110] sm:$0xff]
        %v521 = vld [vmem:[#allocation5 + $0x118] sm:$0xff]
        %v522 = vld [vmem:[#allocation5 + $0x120] sm:$0xff]
        %v523 = vld [vmem:[#allocation5 + $0x128] sm:$0xff]
        %v524 = vld [vmem:[#allocation5 + $0x130] sm:$0xff]
        %v525 = vld [vmem:[#allocation5 + $0x138] sm:$0xff]
        %v526 = vld [vmem:[#allocation7 + $0x4] sm:$0x1]
        %v527 = vperm.slane %v526, 0
        %528 = vmatpush.msra.mxu0 %v525
        %529 = vmatpush.msra.mxu0 %v524
        %530 = vmatpush.msra.mxu0 %v523
        %531 = vmatpush.msra.mxu0 %v522
        %532 = vmatpush.msra.mxu0 %v521
        %533 = vmatpush.msra.mxu0 %v520
        %534 = vmatpush.msra.mxu0 %v519
        %535 = vmatpush.msra.mxu0 %v518
        %536 = vmatpush.msra.mxu0 %v517
        %537 = vmatpush.msra.mxu0 %v516
        %538 = vmatpush.msra.mxu0 %v515
        %539 = vmatpush.msra.mxu0 %v514
        %540 = vmatpush.msra.mxu0 %v513
        %541 = vmatpush.msra.mxu0 %v512
        %542 = vmatpush.msra.mxu0 %v511
        %543 = vmatpush.msra.mxu0 %v510
        %544 = vmatmul.f32.gmra.mxu0 %v509
        %v545 = vpop.f32.mrf.mxu0
        %v546 = vadd.f32 %v527, %v545
        %547 = vdwg.mxu0
        %v548 = vmax.f32 %v546, 0.0
        %v549 = vld [vmem:[#allocation5 + $0x140] sm:$0xff]
        %v550 = vld [vmem:[#allocation5 + $0x148] sm:$0xff]
        %v551 = vld [vmem:[#allocation5 + $0x150] sm:$0xff]
        %v552 = vld [vmem:[#allocation5 + $0x158] sm:$0xff]
        %v553 = vld [vmem:[#allocation7 + $0x5] sm:$0x1]
        %v554 = vperm.slane %v553, 0
        %v556 = vsel %vm476, %v548, 0
        %558 = vmatpush.msra.mxu0 0.0
        %559 = vmatpush.msra.mxu0 0.0
        %560 = vmatpush.msra.mxu0 0.0
        %561 = vmatpush.msra.mxu0 0.0
        %562 = vmatpush.msra.mxu0 0.0
        %563 = vmatpush.msra.mxu0 0.0
        %564 = vmatpush.msra.mxu0 0.0
        %565 = vmatpush.msra.mxu0 0.0
        %566 = vmatpush.msra.mxu0 0.0
        %567 = vmatpush.msra.mxu0 0.0
        %568 = vmatpush.msra.mxu0 0.0
        %569 = vmatpush.msra.mxu0 0.0
        %570 = vmatpush.msra.mxu0 %v552
        %571 = vmatpush.msra.mxu0 %v551
        %572 = vmatpush.msra.mxu0 %v550
        %573 = vmatpush.msra.mxu0 %v549
        %574 = vmatmul.f32.gmra.mxu0 %v556
        %v575 = vpop.f32.mrf.mxu0
        %v576 = vadd.f32 %v554, %v575
        %577 = vdwg.mxu0
        %v578 = vmax.f32 %v576, 0.0
        %v579 = vld [vmem:[#allocation5 + $0x160] sm:$0xff]
        %v580 = vld [vmem:[#allocation5 + $0x168] sm:$0xff]
        %v581 = vld [vmem:[#allocation5 + $0x170] sm:$0xff]
        %v582 = vld [vmem:[#allocation5 + $0x178] sm:$0xff]
        %v583 = vld [vmem:[#allocation7 + $0x6] sm:$0x1]
        %v584 = vperm.slane %v583, 0
        %v586 = vsel %vm476, %v578, 0
        %588 = vmatpush.msra.mxu0 0.0
        %589 = vmatpush.msra.mxu0 0.0
        %590 = vmatpush.msra.mxu0 0.0
        %591 = vmatpush.msra.mxu0 0.0
        %592 = vmatpush.msra.mxu0 0.0
        %593 = vmatpush.msra.mxu0 0.0
        %594 = vmatpush.msra.mxu0 0.0
        %595 = vmatpush.msra.mxu0 0.0
        %596 = vmatpush.msra.mxu0 0.0
        %597 = vmatpush.msra.mxu0 0.0
        %598 = vmatpush.msra.mxu0 0.0
        %599 = vmatpush.msra.mxu0 0.0
        %600 = vmatpush.msra.mxu0 %v582
        %601 = vmatpush.msra.mxu0 %v581
        %602 = vmatpush.msra.mxu0 %v580
        %603 = vmatpush.msra.mxu0 %v579
        %604 = vmatmul.f32.gmra.mxu0 %v586
        %v605 = vpop.f32.mrf.mxu0
        %v606 = vadd.f32 %v584, %v605
        %607 = vdwg.mxu0
        %v608 = vld [vmem:[#allocation5 + $0x180] sm:$0xff]
        %v609 = vld [vmem:[#allocation5 + $0x188] sm:$0xff]
        %v610 = vld [vmem:[#allocation5 + $0x190] sm:$0xff]
        %v611 = vld [vmem:[#allocation5 + $0x198] sm:$0xff]
        %v612 = vld [vmem:[#allocation5 + $0x1a0] sm:$0xff]
        %v613 = vld [vmem:[#allocation5 + $0x1a8] sm:$0xff]
        %v614 = vld [vmem:[#allocation5 + $0x1b0] sm:$0xff]
        %v615 = vld [vmem:[#allocation5 + $0x1b8] sm:$0xff]
        %v616 = vld [vmem:[#allocation5 + $0x1c0] sm:$0xff]
        %v617 = vld [vmem:[#allocation5 + $0x1c8] sm:$0xff]
        %v618 = vld [vmem:[#allocation5 + $0x1d0] sm:$0xff]
        %v619 = vld [vmem:[#allocation5 + $0x1d8] sm:$0xff]
        %v620 = vld [vmem:[#allocation5 + $0x1e0] sm:$0xff]
        %v621 = vld [vmem:[#allocation5 + $0x1e8] sm:$0xff]
        %v622 = vld [vmem:[#allocation5 + $0x1f0] sm:$0xff]
        %v623 = vld [vmem:[#allocation5 + $0x1f8] sm:$0xff]
        %624 = vmatpush.msra.mxu0 %v623
        %625 = vmatpush.msra.mxu0 %v622
        %626 = vmatpush.msra.mxu0 %v621
        %627 = vmatpush.msra.mxu0 %v620
        %628 = vmatpush.msra.mxu0 %v619
        %629 = vmatpush.msra.mxu0 %v618
        %630 = vmatpush.msra.mxu0 %v617
        %631 = vmatpush.msra.mxu0 %v616
        %632 = vmatpush.msra.mxu0 %v615
        %633 = vmatpush.msra.mxu0 %v614
        %634 = vmatpush.msra.mxu0 %v613
        %635 = vmatpush.msra.mxu0 %v612
        %636 = vmatpush.msra.mxu0 %v611
        %637 = vmatpush.msra.mxu0 %v610
        %638 = vmatpush.msra.mxu0 %v609
        %639 = vmatpush.msra.mxu0 %v608
        %640 = vmatmul.f32.gmra.mxu0 %v606
        %v641 = vpop.f32.mrf.mxu0
        %v642 = vadd.f32 0.0, %v641
        %643 = vdwg.mxu0
        %vm644 = vcmp.gt.f32.partialorder %v642, 0.0
        %v645 = vmul.f32 %v642, 0.01
        %v646 = vsel %vm644, %v642, %v645
        %v647 = vsel %vm257, %v646, 0.0
        %v648 = vrot.slane %v647, 4
        %v649 = vadd.f32 %v647, %v648
        %v650 = vrot.slane %v649, 2
        %v651 = vadd.f32 %v649, %v650
        %v652 = vrot.slane %v651, 1
        %v653 = vadd.f32 %v651, %v652
        %v654 = vmul.f32 %v646, %v646
        %v655 = vsel %vm257, %v654, 0.0
        %v656 = vrot.slane %v655, 4
        %v657 = vadd.f32 %v655, %v656
        %v658 = vrot.slane %v657, 2
        %v659 = vadd.f32 %v657, %v658
        %v660 = vrot.slane %v659, 1
        %v661 = vadd.f32 %v659, %v660
        %v662 = vsel %vm273, %v653, %v661
        %663 = vmatpush.msra.mxu0 %v290
        %664 = vmatpush.msra.mxu0 %v289
        %665 = vmatpush.msra.mxu0 %v288
        %666 = vmatpush.msra.mxu0 %v287
        %667 = vmatpush.msra.mxu0 %v286
        %668 = vmatpush.msra.mxu0 %v285
        %669 = vmatpush.msra.mxu0 %v284
        %670 = vmatpush.msra.mxu0 %v283
        %671 = vmatpush.msra.mxu0 %v282
        %672 = vmatpush.msra.mxu0 %v281
        %673 = vmatpush.msra.mxu0 %v280
        %674 = vmatpush.msra.mxu0 %v279
        %675 = vmatpush.msra.mxu0 %v278
        %676 = vmatpush.msra.mxu0 %v277
        %677 = vmatpush.msra.mxu0 %v276
        %678 = vmatpush.msra.mxu0 %v275
        %679 = vmatmul.f32.gmra.mxu0 %v662
        %v680 = vpop.f32.mrf.mxu0
        %v681 = vadd.f32 0.0, %v680
        %682 = vdwg.mxu0
        %v683 = vmul.f32 %v681, %v681
        %v685 = vrot.slane %v683, 7
        %v687 = vsub.f32 %v681, %v685
        %v688 = vadd.f32 %v687, 1e-05
        %v689 = vrsqrt.pop %v688
        %v690 = vmul.f32 %v689, %v688
        %v691 = vmul.f32 %v690, %v689
        %v692 = vmul.f32 0.5, %v691
        %v693 = vsub.f32 1.5, %v692
        %v694 = vmul.f32 %v689, %v693
        %vm695 = vweird.f32 %v688
        %vm696 = vweird.f32 %v689
        %vm697 = vmor %vm695, %vm696
        %v698 = vsel %vm697, %v689, %v694
        %v699 = vsel %vm273, %v681, %v698
        %v701 = vsel %vm330, %v699, 0
        %703 = vmatpush.msra.mxu0 0.0
        %704 = vmatpush.msra.mxu0 0.0
        %705 = vmatpush.msra.mxu0 0.0
        %706 = vmatpush.msra.mxu0 0.0
        %707 = vmatpush.msra.mxu0 0.0
        %708 = vmatpush.msra.mxu0 0.0
        %709 = vmatpush.msra.mxu0 0.0
        %710 = vmatpush.msra.mxu0 0.0
        %711 = vmatpush.msra.mxu0 0.0
        %712 = vmatpush.msra.mxu0 0.0
        %713 = vmatpush.msra.mxu0 0.0
        %714 = vmatpush.msra.mxu0 0.0
        %715 = vmatpush.msra.mxu0 0.0
        %716 = vmatpush.msra.mxu0 0.0
        %717 = vmatpush.msra.mxu0 %v329
        %718 = vmatpush.msra.mxu0 %v328
        %719 = vmatmul.f32.gmra.mxu0 %v701
        %v720 = vpop.f32.mrf.mxu0
        %v721 = vadd.f32 0.0, %v720
        %722 = vdwg.mxu0
        %v723 = vld [vmem:[#allocation7 + $0x7] sm:$0x1]
        %v724 = vperm.slane %v721, 0
        %v725 = vsub.f32 %v646, %v724
        %v726 = vperm.slane %v723, 0
        %v727 = vmul.f32 %v726, %v725
        %v728 = vperm.slane %v721, 1
        %v729 = vmul.f32 %v727, %v728
        %v730 = vld [vmem:[#allocation7 + $0x8] sm:$0x1]
        %v731 = vperm.slane %v730, 0
        %v732 = vadd.f32 %v729, %v731
        %v733 = vld [vmem:[#allocation5 + $0x200] sm:$0xff]
        %v734 = vld [vmem:[#allocation5 + $0x208] sm:$0xff]
        %v735 = vld [vmem:[#allocation5 + $0x210] sm:$0xff]
        %v736 = vld [vmem:[#allocation5 + $0x218] sm:$0xff]
        %v737 = vld [vmem:[#allocation5 + $0x220] sm:$0xff]
        %v738 = vld [vmem:[#allocation5 + $0x228] sm:$0xff]
        %v739 = vld [vmem:[#allocation5 + $0x230] sm:$0xff]
        %v740 = vld [vmem:[#allocation5 + $0x238] sm:$0xff]
        %v741 = vld [vmem:[#allocation5 + $0x240] sm:$0xff]
        %v742 = vld [vmem:[#allocation5 + $0x248] sm:$0xff]
        %v743 = vld [vmem:[#allocation5 + $0x250] sm:$0xff]
        %v744 = vld [vmem:[#allocation5 + $0x258] sm:$0xff]
        %v745 = vld [vmem:[#allocation5 + $0x260] sm:$0xff]
        %v746 = vld [vmem:[#allocation5 + $0x268] sm:$0xff]
        %v747 = vld [vmem:[#allocation5 + $0x270] sm:$0xff]
        %v748 = vld [vmem:[#allocation5 + $0x278] sm:$0xff]
        %749 = vmatpush.msra.mxu0 %v748
        %750 = vmatpush.msra.mxu0 %v747
        %751 = vmatpush.msra.mxu0 %v746
        %752 = vmatpush.msra.mxu0 %v745
        %753 = vmatpush.msra.mxu0 %v744
        %754 = vmatpush.msra.mxu0 %v743
        %755 = vmatpush.msra.mxu0 %v742
        %756 = vmatpush.msra.mxu0 %v741
        %757 = vmatpush.msra.mxu0 %v740
        %758 = vmatpush.msra.mxu0 %v739
        %759 = vmatpush.msra.mxu0 %v738
        %760 = vmatpush.msra.mxu0 %v737
        %761 = vmatpush.msra.mxu0 %v736
        %762 = vmatpush.msra.mxu0 %v735
        %763 = vmatpush.msra.mxu0 %v734
        %764 = vmatpush.msra.mxu0 %v733
        %765 = vmatmul.f32.gmra.mxu0 %v732
        %v766 = vpop.f32.mrf.mxu0
        %v767 = vadd.f32 0.0, %v766
        %768 = vdwg.mxu0
        %vm769 = vcmp.gt.f32.partialorder %v767, 0.0
        %v770 = vmul.f32 %v767, 0.01
        %v771 = vsel %vm769, %v767, %v770
        %773 = vrot.lane.b32.xlu0 %v576, 32
        %v774 = vpop.permute.xlu0 %773
        %v776 = vsel %vm230, %v771, %v774
        %vm777 = vcmask 588800
        %v778 = vsel %vm777, %v776, 0.0
        %779 = vst [vmem:[%s220] sm:$0x3] %v778
        %s780 = sand.u32 %s97, 1
        %s781 = scalar_lea.sflag [#allocation4], %s780
        %s782 = sand.u32 %s97, 1
        %s783 = smul.addr %s782, 2
        %s784 = scalar_lea.vmem [#allocation8], %s783
        // Predicated region
        $region45: #{_forward_packed.1} parent=31 // pred_check
          %p785 = pneg %p107
        $region46: #{_forward_packed.1} parent=31 // pred_check_branch
          %787 = sbr.rel (%p785) target = $region48
        $region47: #{_forward_packed.1} parent=31 // pred_region
          %789 = vsyncadd %s781, 0
          %s790 = smul.addr %s21, 2
          %s791 = scalar_lea.hbm %s3, %s790
          %s793 = sshll.u32 %s784, 4
          %s794 = int_to_ptr.vmem [resolvable:$true] %s793
          %s795 = sshll.u32 %s791, 4
          %s796 = int_to_ptr.hbm [resolvable:$true] %s795
          %798 = dma.vmem_to_hbm [thread:$0]  %s794, 32, %s796, %s781
        $region48: #{_forward_packed.1} parent=31 // pred_fallthru
          _
      $region32: #{_forward_packed.1} parent=5 // pred_fallthru
        _
      %p799 = scmp.le.s32.totalorder 2, %s16
      // Predicated region
      $region49: #{_forward_packed.1} parent=5 // pred_check
        %p800 = pneg %p799
      $region50: #{_forward_packed.1} parent=5 // pred_check_branch
        %802 = sbr.rel (%p800) target = $region52
      $region51: #{_forward_packed.1} parent=5 // pred_region
        %s803 = ssub.s32 %s16, 2
        // Predicated region
        $region53: #{_forward_packed.1} parent=51 // pred_check
          %p804 = pneg %p113
        $region54: #{_forward_packed.1} parent=51 // pred_check_branch
          %806 = sbr.rel (%p804) target = $region56
        $region55: #{_forward_packed.1} parent=51 // pred_region
          %s807 = sand.u32 %s98, 1
          %s808 = scalar_lea.sflag [#allocation4], %s807
          %s809 = sand.u32 %s98, 1
          %s810 = smul.addr %s809, 2
          %s811 = scalar_lea.vmem [#allocation8], %s810
          %813 = dma.done %s808, 32
        $region56: #{_forward_packed.1} parent=51 // pred_fallthru
          _
      $region52: #{_forward_packed.1} parent=5 // pred_fallthru
        _
    $region6: #{_forward_packed.1} parent=1 // loop_footer
      %s20 = sadd.s32 1, %s16
    $region7: #{_forward_packed.1} parent=1 // loop_footer_branch
      %15 = sbr.rel target = $region3
    $region8: #{_forward_packed.1} parent=1 // loop_exit
      _
    %814 = vsyncpa [#allocation3], 1
    %s815 = scalar_lea.sflag [#allocation3], 1
    %816 = vsyncpa %s815, 1
    %817 = vsyncpa [#allocation6], 1
    %818 = vsyncpa [#allocation4], 1
    %s819 = scalar_lea.sflag [#allocation4], 1
    %820 = vsyncpa %s819, 1

</llo_original>
